<compile_context>
chip_gen: v7x
topology: tpu7x:2x2x1
jax: 0.10.0
libtpu: 0.0.40
codegen_flags: <defaults>
</compile_context>

<pallas_src>
import functools

import jax
import jax.numpy as jnp
from jax.experimental import pallas as pl
from jax.experimental.pallas import tpu as pltpu

EPS = 1e-5
LANE = 128      # last-dim (lane) granularity
SUBLANE = 8     # second-to-last (sublane) granularity


def _round_up(x, m):
    return (x + m - 1) // m * m


def _full_spec(shape):
    # Whole array as a single block (empty grid -> index_map takes no args).
    return pl.BlockSpec(shape, lambda: (0,) * len(shape))


def _fused_mlp_kernel(n_valid, n_hidden, *refs):
    """refs = x_ref, [w,b,gamma,beta]*n_hidden, w_final, b_final, o_ref.

    All feature dims are padded to multiples of 128; pad columns carry zero
    weights / zero gamma / zero beta so they stay exactly 0 through every
    layer.  `n_valid` (static) is the number of real batch rows; padded rows
    are excluded from the BN statistics.
    """
    x_ref = refs[0]
    o_ref = refs[-1]

    h = x_ref[...]                       # (N_pad, F0_pad) f32
    n_rows = h.shape[0]

    if n_valid != n_rows:
        row_ids = jax.lax.broadcasted_iota(jnp.int32, (n_rows, 1), 0)
        row_mask = (row_ids < n_valid).astype(jnp.float32)
    else:
        row_mask = None
    inv_n = 1.0 / float(n_valid)

    idx = 1
    for _ in range(n_hidden):
        w_ref, b_ref, g_ref, be_ref = refs[idx:idx + 4]
        idx += 4

        # Linear (MXU, f32 accumulate).
        z = jnp.dot(h, w_ref[...], preferred_element_type=jnp.float32) + b_ref[...]

        # BatchNorm1d (training-mode batch stats), single pass over z:
        # var = E[z^2] - mean^2  (biased, matches torch normalization).
        zm = z if row_mask is None else z * row_mask
        s = jnp.sum(zm, axis=0, keepdims=True)
        ss = jnp.sum(zm * zm, axis=0, keepdims=True)
        mean = s * inv_n
        var = jnp.maximum(ss * inv_n - mean * mean, 0.0)

        # Fold normalization + affine into one scale/shift, then ReLU.
        scale = g_ref[...] * jax.lax.rsqrt(var + EPS)
        shift = be_ref[...] - mean * scale
        h = jnp.maximum(z * scale + shift, 0.0)

    # Final Linear (output is f32; no astype needed).
    w_ref, b_ref = refs[idx], refs[idx + 1]
    o_ref[...] = jnp.dot(h, w_ref[...], preferred_element_type=jnp.float32) + b_ref[...]


def init_mlp_params(key, layer_size):
    """Deterministic init mimicking torch.nn.Linear default U(-1/sqrt(in), 1/sqrt(in))."""
    params = []
    n_layers = len(layer_size) - 1
    keys = jax.random.split(key, 2 * n_layers)
    for i in range(n_layers):
        fan_in, fan_out = layer_size[i], layer_size[i + 1]
        bound = 1.0 / (fan_in ** 0.5)
        w = jax.random.uniform(keys[2 * i], (fan_in, fan_out),
                               minval=-bound, maxval=bound, dtype=jnp.float32)
        b = jax.random.uniform(keys[2 * i + 1], (fan_out,),
                               minval=-bound, maxval=bound, dtype=jnp.float32)
        if i < n_layers - 1:
            gamma = jnp.ones((fan_out,), jnp.float32)
            beta = jnp.zeros((fan_out,), jnp.float32)
            params.append(("hidden", w, b, gamma, beta))
        else:
            params.append(("final", w, b))
    return params


def mlp_forward(params, x):
    """Fused forward pass: one pallas_call for the whole MLP."""
    n, f_in = x.shape
    n_pad = _round_up(max(n, SUBLANE), SUBLANE)
    f_in_pad = _round_up(f_in, LANE)

    # Zero-pad the input to lane/sublane-dense shape.
    x_p = jnp.zeros((n_pad, f_in_pad), jnp.float32).at[:n, :f_in].set(x)

    args = [x_p]
    in_specs = [_full_spec(x_p.shape)]
    n_hidden = 0
    out_pad, out_true = f_in_pad, f_in

    for layer in params:
        if layer[0] == "hidden":
            _, w, b, gamma, beta = layer
            fi, fo = w.shape
            fi_p, fo_p = _round_up(fi, LANE), _round_up(fo, LANE)
            w_p = jnp.zeros((fi_p, fo_p), jnp.float32).at[:fi, :fo].set(w)
            b_p = jnp.zeros((1, fo_p), jnp.float32).at[0, :fo].set(b)
            g_p = jnp.zeros((1, fo_p), jnp.float32).at[0, :fo].set(gamma)
            be_p = jnp.zeros((1, fo_p), jnp.float32).at[0, :fo].set(beta)
            args += [w_p, b_p, g_p, be_p]
            in_specs += [_full_spec(a.shape) for a in (w_p, b_p, g_p, be_p)]
            n_hidden += 1
            out_pad, out_true = fo_p, fo
        else:
            _, w, b = layer
            fi, fo = w.shape
            fi_p, fo_p = _round_up(fi, LANE), _round_up(fo, LANE)
            w_p = jnp.zeros((fi_p, fo_p), jnp.float32).at[:fi, :fo].set(w)
            b_p = jnp.zeros((1, fo_p), jnp.float32).at[0, :fo].set(b)
            args += [w_p, b_p]
            in_specs += [_full_spec(w_p.shape), _full_spec(b_p.shape)]
            out_pad, out_true = fo_p, fo

    kernel = functools.partial(_fused_mlp_kernel, n, n_hidden)

    y_p = pl.pallas_call(
        kernel,
        out_shape=jax.ShapeDtypeStruct((n_pad, out_pad), jnp.float32),
        in_specs=in_specs,
        out_specs=_full_spec((n_pad, out_pad)),
        compiler_params=pltpu.CompilerParams(
            # Tiny working set (<1 MiB); 32 MiB is safely within scoped VMEM on
            # v5e (128 MiB), v6e (128 MiB) and v7x (64 MiB).
            vmem_limit_bytes=32 * 1024 * 1024),
    )(*args)

    # Strip the padding.
    return y_p[:n, :out_true]


if __name__ == "__main__":
    layer_size = [32, 64, 48, 16]   # two (Linear+BN+ReLU) blocks + final Linear
    batch = 128                      # multiple of 8 sublanes; fills the MXU M-dim

    key = jax.random.PRNGKey(0)
    k_params, k_x = jax.random.split(key)
    params = init_mlp_params(k_params, layer_size)
    x = jax.random.normal(k_x, (batch, layer_size[0]), dtype=jnp.float32)

    y = mlp_forward(params, x)
    jax.block_until_ready(y)

    # Pure-JAX reference with identical semantics (unpadded, f32).
    ref = x
    for layer in params:
        if layer[0] == "hidden":
            _, w, b, gamma, beta = layer
            h = ref @ w + b
            mean = h.mean(axis=0, keepdims=True)
            var = ((h - mean) ** 2).mean(axis=0, keepdims=True)
            ref = jnp.maximum((h - mean) / jnp.sqrt(var + EPS) * gamma + beta, 0.0)
        else:
            _, w, b = layer
            ref = ref @ w + b

    assert y.shape == (batch, layer_size[-1]), f"bad output shape {y.shape}"
    assert jnp.allclose(y, ref, atol=1e-4, rtol=1e-4), "mismatch vs reference"

    print("KERNEL_OK")
</pallas_src>

<mosaic_0001>
module attributes {stable_mosaic.version = 11 : i64} {
  func.func @_fused_mlp_kernel(%arg0: memref<128x128xf32, #tpu.memory_space<vmem>>, %arg1: memref<128x128xf32, #tpu.memory_space<vmem>>, %arg2: memref<1x128xf32, #tpu.memory_space<vmem>>, %arg3: memref<1x128xf32, #tpu.memory_space<vmem>>, %arg4: memref<1x128xf32, #tpu.memory_space<vmem>>, %arg5: memref<128x128xf32, #tpu.memory_space<vmem>>, %arg6: memref<1x128xf32, #tpu.memory_space<vmem>>, %arg7: memref<1x128xf32, #tpu.memory_space<vmem>>, %arg8: memref<1x128xf32, #tpu.memory_space<vmem>>, %arg9: memref<128x128xf32, #tpu.memory_space<vmem>>, %arg10: memref<1x128xf32, #tpu.memory_space<vmem>>, %arg11: memref<128x128xf32, #tpu.memory_space<vmem>>) attributes {dimension_semantics = [], scalar_prefetch = 0 : i64, scratch_operands = 0 : i64, tpu.core_type = #tpu.core_type<tc>} {
    %c0 = arith.constant 0 : index
    %c0_0 = arith.constant 0 : index
    %0 = vector.load %arg0[%c0, %c0_0] : memref<128x128xf32, #tpu.memory_space<vmem>>, vector<128x128xf32>
    %c0_1 = arith.constant 0 : index
    %c0_2 = arith.constant 0 : index
    %1 = vector.load %arg1[%c0_1, %c0_2] : memref<128x128xf32, #tpu.memory_space<vmem>>, vector<128x128xf32>
    %cst = arith.constant dense<0.000000e+00> : vector<128x128xf32>
    %2 = tpu.matmul %0, %1, %cst {dimension_numbers = #tpu.dot_dimension_numbers<[1], [0], [0], [1], [0, 0, 1, 1], [], []>} : vector<128x128xf32>, vector<128x128xf32>, vector<128x128xf32> -> vector<128x128xf32>
    %c0_3 = arith.constant 0 : index
    %c0_4 = arith.constant 0 : index
    %3 = vector.load %arg2[%c0_3, %c0_4] : memref<1x128xf32, #tpu.memory_space<vmem>>, vector<1x128xf32>
    %4 = vector.broadcast %3 : vector<1x128xf32> to vector<128x128xf32>
    %5 = arith.addf %2, %4 : vector<128x128xf32>
    %cst_5 = arith.constant dense<0.000000e+00> : vector<128xf32>
    %6 = vector.multi_reduction <add>, %5, %cst_5 [0] : vector<128x128xf32> to vector<128xf32>
    %7 = vector.shape_cast %6 : vector<128xf32> to vector<1x128xf32>
    %8 = arith.mulf %5, %5 : vector<128x128xf32>
    %cst_6 = arith.constant dense<0.000000e+00> : vector<128xf32>
    %9 = vector.multi_reduction <add>, %8, %cst_6 [0] : vector<128x128xf32> to vector<128xf32>
    %10 = vector.shape_cast %9 : vector<128xf32> to vector<1x128xf32>
    %cst_7 = arith.constant 7.812500e-03 : f32
    %11 = vector.broadcast %cst_7 : f32 to vector<1x128xf32>
    %12 = arith.mulf %7, %11 : vector<1x128xf32>
    %cst_8 = arith.constant 7.812500e-03 : f32
    %13 = vector.broadcast %cst_8 : f32 to vector<1x128xf32>
    %14 = arith.mulf %10, %13 : vector<1x128xf32>
    %15 = arith.mulf %12, %12 : vector<1x128xf32>
    %16 = arith.subf %14, %15 : vector<1x128xf32>
    %cst_9 = arith.constant 0.000000e+00 : f32
    %17 = vector.broadcast %cst_9 : f32 to vector<1x128xf32>
    %18 = arith.maximumf %16, %17 : vector<1x128xf32>
    %c0_10 = arith.constant 0 : index
    %c0_11 = arith.constant 0 : index
    %19 = vector.load %arg3[%c0_10, %c0_11] : memref<1x128xf32, #tpu.memory_space<vmem>>, vector<1x128xf32>
    %cst_12 = arith.constant 9.99999974E-6 : f32
    %20 = vector.broadcast %cst_12 : f32 to vector<1x128xf32>
    %21 = arith.addf %18, %20 : vector<1x128xf32>
    %22 = math.rsqrt %21 : vector<1x128xf32>
    %23 = arith.mulf %19, %22 : vector<1x128xf32>
    %c0_13 = arith.constant 0 : index
    %c0_14 = arith.constant 0 : index
    %24 = vector.load %arg4[%c0_13, %c0_14] : memref<1x128xf32, #tpu.memory_space<vmem>>, vector<1x128xf32>
    %25 = arith.mulf %12, %23 : vector<1x128xf32>
    %26 = arith.subf %24, %25 : vector<1x128xf32>
    %27 = vector.broadcast %23 : vector<1x128xf32> to vector<128x128xf32>
    %28 = arith.mulf %5, %27 : vector<128x128xf32>
    %29 = vector.broadcast %26 : vector<1x128xf32> to vector<128x128xf32>
    %30 = arith.addf %28, %29 : vector<128x128xf32>
    %cst_15 = arith.constant 0.000000e+00 : f32
    %31 = vector.broadcast %cst_15 : f32 to vector<128x128xf32>
    %32 = arith.maximumf %30, %31 : vector<128x128xf32>
    %c0_16 = arith.constant 0 : index
    %c0_17 = arith.constant 0 : index
    %33 = vector.load %arg5[%c0_16, %c0_17] : memref<128x128xf32, #tpu.memory_space<vmem>>, vector<128x128xf32>
    %cst_18 = arith.constant dense<0.000000e+00> : vector<128x128xf32>
    %34 = tpu.matmul %32, %33, %cst_18 {dimension_numbers = #tpu.dot_dimension_numbers<[1], [0], [0], [1], [0, 0, 1, 1], [], []>} : vector<128x128xf32>, vector<128x128xf32>, vector<128x128xf32> -> vector<128x128xf32>
    %c0_19 = arith.constant 0 : index
    %c0_20 = arith.constant 0 : index
    %35 = vector.load %arg6[%c0_19, %c0_20] : memref<1x128xf32, #tpu.memory_space<vmem>>, vector<1x128xf32>
    %36 = vector.broadcast %35 : vector<1x128xf32> to vector<128x128xf32>
    %37 = arith.addf %34, %36 : vector<128x128xf32>
    %cst_21 = arith.constant dense<0.000000e+00> : vector<128xf32>
    %38 = vector.multi_reduction <add>, %37, %cst_21 [0] : vector<128x128xf32> to vector<128xf32>
    %39 = vector.shape_cast %38 : vector<128xf32> to vector<1x128xf32>
    %40 = arith.mulf %37, %37 : vector<128x128xf32>
    %cst_22 = arith.constant dense<0.000000e+00> : vector<128xf32>
    %41 = vector.multi_reduction <add>, %40, %cst_22 [0] : vector<128x128xf32> to vector<128xf32>
    %42 = vector.shape_cast %41 : vector<128xf32> to vector<1x128xf32>
    %cst_23 = arith.constant 7.812500e-03 : f32
    %43 = vector.broadcast %cst_23 : f32 to vector<1x128xf32>
    %44 = arith.mulf %39, %43 : vector<1x128xf32>
    %cst_24 = arith.constant 7.812500e-03 : f32
    %45 = vector.broadcast %cst_24 : f32 to vector<1x128xf32>
    %46 = arith.mulf %42, %45 : vector<1x128xf32>
    %47 = arith.mulf %44, %44 : vector<1x128xf32>
    %48 = arith.subf %46, %47 : vector<1x128xf32>
    %cst_25 = arith.constant 0.000000e+00 : f32
    %49 = vector.broadcast %cst_25 : f32 to vector<1x128xf32>
    %50 = arith.maximumf %48, %49 : vector<1x128xf32>
    %c0_26 = arith.constant 0 : index
    %c0_27 = arith.constant 0 : index
    %51 = vector.load %arg7[%c0_26, %c0_27] : memref<1x128xf32, #tpu.memory_space<vmem>>, vector<1x128xf32>
    %cst_28 = arith.constant 9.99999974E-6 : f32
    %52 = vector.broadcast %cst_28 : f32 to vector<1x128xf32>
    %53 = arith.addf %50, %52 : vector<1x128xf32>
    %54 = math.rsqrt %53 : vector<1x128xf32>
    %55 = arith.mulf %51, %54 : vector<1x128xf32>
    %c0_29 = arith.constant 0 : index
    %c0_30 = arith.constant 0 : index
    %56 = vector.load %arg8[%c0_29, %c0_30] : memref<1x128xf32, #tpu.memory_space<vmem>>, vector<1x128xf32>
    %57 = arith.mulf %44, %55 : vector<1x128xf32>
    %58 = arith.subf %56, %57 : vector<1x128xf32>
    %59 = vector.broadcast %55 : vector<1x128xf32> to vector<128x128xf32>
    %60 = arith.mulf %37, %59 : vector<128x128xf32>
    %61 = vector.broadcast %58 : vector<1x128xf32> to vector<128x128xf32>
    %62 = arith.addf %60, %61 : vector<128x128xf32>
    %cst_31 = arith.constant 0.000000e+00 : f32
    %63 = vector.broadcast %cst_31 : f32 to vector<128x128xf32>
    %64 = arith.maximumf %62, %63 : vector<128x128xf32>
    %c0_32 = arith.constant 0 : index
    %c0_33 = arith.constant 0 : index
    %65 = vector.load %arg9[%c0_32, %c0_33] : memref<128x128xf32, #tpu.memory_space<vmem>>, vector<128x128xf32>
    %cst_34 = arith.constant dense<0.000000e+00> : vector<128x128xf32>
    %66 = tpu.matmul %64, %65, %cst_34 {dimension_numbers = #tpu.dot_dimension_numbers<[1], [0], [0], [1], [0, 0, 1, 1], [], []>} : vector<128x128xf32>, vector<128x128xf32>, vector<128x128xf32> -> vector<128x128xf32>
    %c0_35 = arith.constant 0 : index
    %c0_36 = arith.constant 0 : index
    %67 = vector.load %arg10[%c0_35, %c0_36] : memref<1x128xf32, #tpu.memory_space<vmem>>, vector<1x128xf32>
    %68 = vector.broadcast %67 : vector<1x128xf32> to vector<128x128xf32>
    %69 = arith.addf %66, %68 : vector<128x128xf32>
    %c0_37 = arith.constant 0 : index
    %c0_38 = arith.constant 0 : index
    %70 = vector.load %arg11[%c0_37, %c0_38] : memref<128x128xf32, #tpu.memory_space<vmem>>, vector<128x128xf32>
    tpu.vector_store %arg11[%c0_37, %c0_38], %69 {strides = array<i32>} : memref<128x128xf32, #tpu.memory_space<vmem>>, vector<128x128xf32>,
    return
  }
}

</mosaic_0001>

<llo_original>
// kernel: tpu_custom_call.1
$region0: #{tpu_custom_call.1}
  #allocation0 [shape = 'u32[]', space=smem, size = 0x4, offset = 0x4, fixed_abs, tag = 'smem constant byte address 0x4 - core index']
  #allocation1 [shape = 'u32[144,128]{1,0:T(1,128)}', space=vmem, size = 0x12000, scoped, tag = 'internal scratch']
  %s0 = inlined_call_operand.hbm [shape: f32[128,128], index: 0, kind: input, shape index: {}]
  %s1 = inlined_call_operand.hbm [shape: f32[128,128], index: 1, kind: input, shape index: {}]
  %s2 = inlined_call_operand.vmem [shape: f32[1,128], index: 2, kind: input, shape index: {}]
  %s3 = inlined_call_operand.vmem [shape: f32[1,128], index: 3, kind: input, shape index: {}]
  %s4 = inlined_call_operand.vmem [shape: f32[1,128], index: 4, kind: input, shape index: {}]
  %s5 = inlined_call_operand.hbm [shape: f32[128,128], index: 5, kind: input, shape index: {}]
  %s6 = inlined_call_operand.vmem [shape: f32[1,128], index: 6, kind: input, shape index: {}]
  %s7 = inlined_call_operand.vmem [shape: f32[1,128], index: 7, kind: input, shape index: {}]
  %s8 = inlined_call_operand.vmem [shape: f32[1,128], index: 8, kind: input, shape index: {}]
  %s9 = inlined_call_operand.hbm [shape: f32[128,128], index: 9, kind: input, shape index: {}]
  %s10 = inlined_call_operand.vmem [shape: f32[1,128], index: 10, kind: input, shape index: {}]
  %s11 = inlined_call_operand.hbm [shape: f32[128,128], index: 11, kind: output, shape index: {}]
  %s12 = sld [smem:[#allocation0]]
  $region70: #{tpu_custom_call.1} parent=0
    _
  %s14 = ssub.s32 1, %s12
  %s15 = scalar_select 0, %s14, %s12
  $region1: #{tpu_custom_call.1} parent=0
    #allocation2 [shape = 'u8[65536]{0}', space=vmem, size = 0x10000, scoped, tag = 'input window, operand 0, single buffered']
    #allocation3 [shape = 's32[1]{0}', space=sflag, size = 0x4, scoped, tag = 'scoped memory for tpu_custom_call.1']
    #allocation4 [shape = 's32[1]{0}', space=sflag, size = 0x4, scoped, tag = 'scoped memory for tpu_custom_call.1']
    #allocation5 [shape = 'u8[65536]{0}', space=vmem, size = 0x10000, scoped, tag = 'input window, operand 1, single buffered']
    #allocation6 [shape = 's32[1]{0}', space=sflag, size = 0x4, scoped, tag = 'scoped memory for tpu_custom_call.1']
    #allocation7 [shape = 'u8[65536]{0}', space=vmem, size = 0x10000, scoped, tag = 'input window, operand 5, single buffered']
    #allocation8 [shape = 'u8[65536]{0}', space=vmem, size = 0x10000, scoped, tag = 'input window, operand 9, single buffered']
    #allocation9 [shape = 's32[1]{0}', space=sflag, size = 0x4, scoped, tag = 'scoped memory for tpu_custom_call.1']
    #allocation10 [shape = 'u8[65536]{0}', space=vmem, size = 0x10000, scoped, tag = 'output window, operand 0, single buffered']
    %16 = vsyncpa [#allocation3], 0
    %17 = vsyncpa [#allocation6], 0
    %18 = vsyncpa [#allocation9], 0
    %19 = vsyncpa [#allocation4], 0
    // Predicated region
    $region2: #{tpu_custom_call.1} parent=1 // pred_check
      _
    $region3: #{tpu_custom_call.1} parent=1 // pred_check_branch
      %21 = sbr.rel (0) target = $region5
    $region4: #{tpu_custom_call.1} parent=1 // pred_region
      %s23 = ssub.s32 2048, 2048
      %24 = vsyncadd [#allocation3], %s23
      %s25 = sshll.u32 [#allocation2], 4
      %s26 = int_to_ptr.vmem [resolvable:$true] %s25
      %31 = dma.hbm_to_vmem [thread:$0]  %s0, 2048, %s26, [#allocation3], 128, 128, 8
    $region5: #{tpu_custom_call.1} parent=1 // pred_fallthru
      _
    // Predicated region
    $region6: #{tpu_custom_call.1} parent=1 // pred_check
      _
    $region7: #{tpu_custom_call.1} parent=1 // pred_check_branch
      %33 = sbr.rel (0) target = $region9
    $region8: #{tpu_custom_call.1} parent=1 // pred_region
      %s35 = ssub.s32 2048, 2048
      %36 = vsyncadd [#allocation6], %s35
      %s37 = sshll.u32 [#allocation5], 4
      %s38 = int_to_ptr.vmem [resolvable:$true] %s37
      %43 = dma.hbm_to_vmem [thread:$0]  %s1, 2048, %s38, [#allocation6], 128, 128, 8
    $region9: #{tpu_custom_call.1} parent=1 // pred_fallthru
      _
    // Predicated region
    $region10: #{tpu_custom_call.1} parent=1 // pred_check
      _
    $region11: #{tpu_custom_call.1} parent=1 // pred_check_branch
      %45 = sbr.rel (0) target = $region13
    $region12: #{tpu_custom_call.1} parent=1 // pred_region
      _
    $region13: #{tpu_custom_call.1} parent=1 // pred_fallthru
      _
    // Predicated region
    $region14: #{tpu_custom_call.1} parent=1 // pred_check
      _
    $region15: #{tpu_custom_call.1} parent=1 // pred_check_branch
      %47 = sbr.rel (0) target = $region17
    $region16: #{tpu_custom_call.1} parent=1 // pred_region
      _
    $region17: #{tpu_custom_call.1} parent=1 // pred_fallthru
      _
    // Predicated region
    $region18: #{tpu_custom_call.1} parent=1 // pred_check
      _
    $region19: #{tpu_custom_call.1} parent=1 // pred_check_branch
      %49 = sbr.rel (0) target = $region21
    $region20: #{tpu_custom_call.1} parent=1 // pred_region
      _
    $region21: #{tpu_custom_call.1} parent=1 // pred_fallthru
      _
    // Predicated region
    $region22: #{tpu_custom_call.1} parent=1 // pred_check
      _
    $region23: #{tpu_custom_call.1} parent=1 // pred_check_branch
      %51 = sbr.rel (0) target = $region25
    $region24: #{tpu_custom_call.1} parent=1 // pred_region
      %s53 = ssub.s32 2048, 2048
      %54 = vsyncadd [#allocation6], %s53
      %s55 = sshll.u32 [#allocation7], 4
      %s56 = int_to_ptr.vmem [resolvable:$true] %s55
      %61 = dma.hbm_to_vmem [thread:$0]  %s5, 2048, %s56, [#allocation6], 128, 128, 8
    $region25: #{tpu_custom_call.1} parent=1 // pred_fallthru
      _
    // Predicated region
    $region26: #{tpu_custom_call.1} parent=1 // pred_check
      _
    $region27: #{tpu_custom_call.1} parent=1 // pred_check_branch
      %63 = sbr.rel (0) target = $region29
    $region28: #{tpu_custom_call.1} parent=1 // pred_region
      _
    $region29: #{tpu_custom_call.1} parent=1 // pred_fallthru
      _
    // Predicated region
    $region30: #{tpu_custom_call.1} parent=1 // pred_check
      _
    $region31: #{tpu_custom_call.1} parent=1 // pred_check_branch
      %65 = sbr.rel (0) target = $region33
    $region32: #{tpu_custom_call.1} parent=1 // pred_region
      _
    $region33: #{tpu_custom_call.1} parent=1 // pred_fallthru
      _
    // Predicated region
    $region34: #{tpu_custom_call.1} parent=1 // pred_check
      _
    $region35: #{tpu_custom_call.1} parent=1 // pred_check_branch
      %67 = sbr.rel (0) target = $region37
    $region36: #{tpu_custom_call.1} parent=1 // pred_region
      _
    $region37: #{tpu_custom_call.1} parent=1 // pred_fallthru
      _
    // Predicated region
    $region38: #{tpu_custom_call.1} parent=1 // pred_check
      _
    $region39: #{tpu_custom_call.1} parent=1 // pred_check_branch
      %69 = sbr.rel (0) target = $region41
    $region40: #{tpu_custom_call.1} parent=1 // pred_region
      %s71 = ssub.s32 2048, 2048
      %72 = vsyncadd [#allocation9], %s71
      %s73 = sshll.u32 [#allocation8], 4
      %s74 = int_to_ptr.vmem [resolvable:$true] %s73
      %79 = dma.hbm_to_vmem [thread:$0]  %s9, 2048, %s74, [#allocation9], 128, 128, 8
    $region41: #{tpu_custom_call.1} parent=1 // pred_fallthru
      _
    // Predicated region
    $region42: #{tpu_custom_call.1} parent=1 // pred_check
      _
    $region43: #{tpu_custom_call.1} parent=1 // pred_check_branch
      %81 = sbr.rel (0) target = $region45
    $region44: #{tpu_custom_call.1} parent=1 // pred_region
      _
    $region45: #{tpu_custom_call.1} parent=1 // pred_fallthru
      _
    // Predicated region
    $region46: #{tpu_custom_call.1} parent=1 // pred_check
      _
    $region47: #{tpu_custom_call.1} parent=1 // pred_check_branch
      %83 = sbr.rel (0) target = $region49
    $region48: #{tpu_custom_call.1} parent=1 // pred_region
      %84 = dma.done [#allocation3], 2048
    $region49: #{tpu_custom_call.1} parent=1 // pred_fallthru
      _
    // Predicated region
    $region50: #{tpu_custom_call.1} parent=1 // pred_check
      _
    $region51: #{tpu_custom_call.1} parent=1 // pred_check_branch
      %86 = sbr.rel (0) target = $region53
    $region52: #{tpu_custom_call.1} parent=1 // pred_region
      %87 = dma.done [#allocation6], 2048
    $region53: #{tpu_custom_call.1} parent=1 // pred_fallthru
      _
    // Predicated region
    $region54: #{tpu_custom_call.1} parent=1 // pred_check
      _
    $region55: #{tpu_custom_call.1} parent=1 // pred_check_branch
      %89 = sbr.rel (0) target = $region57
    $region56: #{tpu_custom_call.1} parent=1 // pred_region
      %90 = dma.done [#allocation6], 2048
    $region57: #{tpu_custom_call.1} parent=1 // pred_fallthru
      _
    // Predicated region
    $region58: #{tpu_custom_call.1} parent=1 // pred_check
      _
    $region59: #{tpu_custom_call.1} parent=1 // pred_check_branch
      %92 = sbr.rel (0) target = $region61
    $region60: #{tpu_custom_call.1} parent=1 // pred_region
      %93 = dma.done [#allocation9], 2048
    $region61: #{tpu_custom_call.1} parent=1 // pred_fallthru
      _
    %v94 = vld [vmem:[#allocation2] sm:$0xff]
    %v95 = vld [vmem:[#allocation2 + $0x8] sm:$0xff]
    %v96 = vld [vmem:[#allocation2 + $0x10] sm:$0xff]
    %v97 = vld [vmem:[#allocation2 + $0x18] sm:$0xff]
    %v98 = vld [vmem:[#allocation2 + $0x20] sm:$0xff]
    %v99 = vld [vmem:[#allocation2 + $0x28] sm:$0xff]
    %v100 = vld [vmem:[#allocation2 + $0x30] sm:$0xff]
    %v101 = vld [vmem:[#allocation2 + $0x38] sm:$0xff]
    %v102 = vld [vmem:[#allocation2 + $0x40] sm:$0xff]
    %v103 = vld [vmem:[#allocation2 + $0x48] sm:$0xff]
    %v104 = vld [vmem:[#allocation2 + $0x50] sm:$0xff]
    %v105 = vld [vmem:[#allocation2 + $0x58] sm:$0xff]
    %v106 = vld [vmem:[#allocation2 + $0x60] sm:$0xff]
    %v107 = vld [vmem:[#allocation2 + $0x68] sm:$0xff]
    %v108 = vld [vmem:[#allocation2 + $0x70] sm:$0xff]
    %v109 = vld [vmem:[#allocation2 + $0x78] sm:$0xff]
    %v110 = vld [vmem:[#allocation5] sm:$0xff]
    %v111 = vld [vmem:[#allocation5 + $0x8] sm:$0xff]
    %v112 = vld [vmem:[#allocation5 + $0x10] sm:$0xff]
    %v113 = vld [vmem:[#allocation5 + $0x18] sm:$0xff]
    %v114 = vld [vmem:[#allocation5 + $0x20] sm:$0xff]
    %v115 = vld [vmem:[#allocation5 + $0x28] sm:$0xff]
    %v116 = vld [vmem:[#allocation5 + $0x30] sm:$0xff]
    %v117 = vld [vmem:[#allocation5 + $0x38] sm:$0xff]
    %v118 = vld [vmem:[#allocation5 + $0x40] sm:$0xff]
    %v119 = vld [vmem:[#allocation5 + $0x48] sm:$0xff]
    %v120 = vld [vmem:[#allocation5 + $0x50] sm:$0xff]
    %v121 = vld [vmem:[#allocation5 + $0x58] sm:$0xff]
    %v122 = vld [vmem:[#allocation5 + $0x60] sm:$0xff]
    %v123 = vld [vmem:[#allocation5 + $0x68] sm:$0xff]
    %v124 = vld [vmem:[#allocation5 + $0x70] sm:$0xff]
    %v125 = vld [vmem:[#allocation5 + $0x78] sm:$0xff]
    %v126 = vld [vmem:[%s2] sm:$0x1]
    %v128 = vlaneseq
    %v129 = vshrl.u32 %v128, 7
    %v130 = vsub.s32 0, %v129
    %v131 = vrot.slane %v126, %v130
    %133 = vmatprep.subr.mxu0 0.0
    %134 = vmatpush1.msra.mxu0 %v110
    %135 = vmatprep.subr.mxu0 0.0
    %136 = vmatpush1.msra.mxu0 %v111
    %137 = vmatprep.subr.mxu0 0.0
    %138 = vmatpush1.msra.mxu0 %v112
    %139 = vmatprep.subr.mxu0 0.0
    %140 = vmatpush1.msra.mxu0 %v113
    %141 = vmatprep.subr.mxu0 0.0
    %142 = vmatpush1.msra.mxu0 %v114
    %143 = vmatprep.subr.mxu0 0.0
    %144 = vmatpush1.msra.mxu0 %v115
    %145 = vmatprep.subr.mxu0 0.0
    %146 = vmatpush1.msra.mxu0 %v116
    %147 = vmatprep.subr.mxu0 0.0
    %148 = vmatpush1.msra.mxu0 %v117
    %149 = vmatprep.subr.mxu0 0.0
    %150 = vmatpush1.msra.mxu0 %v118
    %151 = vmatprep.subr.mxu0 0.0
    %152 = vmatpush1.msra.mxu0 %v119
    %153 = vmatprep.subr.mxu0 0.0
    %154 = vmatpush1.msra.mxu0 %v120
    %155 = vmatprep.subr.mxu0 0.0
    %156 = vmatpush1.msra.mxu0 %v121
    %157 = vmatprep.subr.mxu0 0.0
    %158 = vmatpush1.msra.mxu0 %v122
    %159 = vmatprep.subr.mxu0 0.0
    %160 = vmatpush1.msra.mxu0 %v123
    %161 = vmatprep.subr.mxu0 0.0
    %162 = vmatpush1.msra.mxu0 %v124
    %163 = vmatprep.subr.mxu0 0.0
    %164 = vmatpush1.msra.mxu0 %v125
    %165 = vmatprep.subr.mxu0 0.0
    %166 = vmatpush1.msra.mxu0 0.0
    %167 = vmatprep.subr.mxu0 0.0
    %168 = vmatpush1.msra.mxu0 0.0
    %169 = vmatprep.subr.mxu0 0.0
    %170 = vmatpush1.msra.mxu0 0.0
    %171 = vmatprep.subr.mxu0 0.0
    %172 = vmatpush1.msra.mxu0 0.0
    %173 = vmatprep.subr.mxu0 0.0
    %174 = vmatpush1.msra.mxu0 0.0
    %175 = vmatprep.subr.mxu0 0.0
    %176 = vmatpush1.msra.mxu0 0.0
    %177 = vmatprep.subr.mxu0 0.0
    %178 = vmatpush1.msra.mxu0 0.0
    %179 = vmatprep.subr.mxu0 0.0
    %180 = vmatpush1.msra.mxu0 0.0
    %181 = vmatprep.subr.mxu0 0.0
    %182 = vmatpush1.msra.mxu0 0.0
    %183 = vmatprep.subr.mxu0 0.0
    %184 = vmatpush1.msra.mxu0 0.0
    %185 = vmatprep.subr.mxu0 0.0
    %186 = vmatpush1.msra.mxu0 0.0
    %187 = vmatprep.subr.mxu0 0.0
    %188 = vmatpush1.msra.mxu0 0.0
    %189 = vmatprep.subr.mxu0 0.0
    %190 = vmatpush1.msra.mxu0 0.0
    %191 = vmatprep.subr.mxu0 0.0
    %192 = vmatpush1.msra.mxu0 0.0
    %193 = vmatprep.subr.mxu0 0.0
    %194 = vmatpush1.msra.mxu0 0.0
    %195 = vmatprep.subr.mxu0 0.0
    %196 = vmatpush1.msra.mxu0 0.0
    %197 = vmatprep.mubr.f32.mxu0 0.0
    %198 = vmatmul.mubr.f32.gmra.mrb[0].mxu0 %v94
    %v199 = vpop.f32.mrb[0].mxu0
    %v200 = vadd.f32 %v131, %v199
    %v201 = vpop.f32.mrb[0].mxu0
    %202 = vmatprep.mubr.f32.mxu0 0.0
    %203 = vmatmul.mubr.f32.gmra.mrb[0].mxu0 %v95
    %v204 = vpop.f32.mrb[0].mxu0
    %v205 = vadd.f32 %v131, %v204
    %v206 = vpop.f32.mrb[0].mxu0
    %207 = vmatprep.mubr.f32.mxu0 0.0
    %208 = vmatmul.mubr.f32.gmra.mrb[0].mxu0 %v96
    %v209 = vpop.f32.mrb[0].mxu0
    %v210 = vadd.f32 %v131, %v209
    %v211 = vpop.f32.mrb[0].mxu0
    %212 = vmatprep.mubr.f32.mxu0 0.0
    %213 = vmatmul.mubr.f32.gmra.mrb[0].mxu0 %v97
    %v214 = vpop.f32.mrb[0].mxu0
    %v215 = vadd.f32 %v131, %v214
    %v216 = vpop.f32.mrb[0].mxu0
    %217 = vmatprep.mubr.f32.mxu0 0.0
    %218 = vmatmul.mubr.f32.gmra.mrb[0].mxu0 %v98
    %v219 = vpop.f32.mrb[0].mxu0
    %v220 = vadd.f32 %v131, %v219
    %v221 = vpop.f32.mrb[0].mxu0
    %222 = vmatprep.mubr.f32.mxu0 0.0
    %223 = vmatmul.mubr.f32.gmra.mrb[0].mxu0 %v99
    %v224 = vpop.f32.mrb[0].mxu0
    %v225 = vadd.f32 %v131, %v224
    %v226 = vpop.f32.mrb[0].mxu0
    %227 = vmatprep.mubr.f32.mxu0 0.0
    %228 = vmatmul.mubr.f32.gmra.mrb[0].mxu0 %v100
    %v229 = vpop.f32.mrb[0].mxu0
    %v230 = vadd.f32 %v131, %v229
    %v231 = vpop.f32.mrb[0].mxu0
    %232 = vmatprep.mubr.f32.mxu0 0.0
    %233 = vmatmul.mubr.f32.gmra.mrb[0].mxu0 %v101
    %v234 = vpop.f32.mrb[0].mxu0
    %v235 = vadd.f32 %v131, %v234
    %v236 = vpop.f32.mrb[0].mxu0
    %237 = vmatprep.mubr.f32.mxu0 0.0
    %238 = vmatmul.mubr.f32.gmra.mrb[0].mxu0 %v102
    %v239 = vpop.f32.mrb[0].mxu0
    %v240 = vadd.f32 %v131, %v239
    %v241 = vpop.f32.mrb[0].mxu0
    %242 = vmatprep.mubr.f32.mxu0 0.0
    %243 = vmatmul.mubr.f32.gmra.mrb[0].mxu0 %v103
    %v244 = vpop.f32.mrb[0].mxu0
    %v245 = vadd.f32 %v131, %v244
    %v246 = vpop.f32.mrb[0].mxu0
    %247 = vmatprep.mubr.f32.mxu0 0.0
    %248 = vmatmul.mubr.f32.gmra.mrb[0].mxu0 %v104
    %v249 = vpop.f32.mrb[0].mxu0
    %v250 = vadd.f32 %v131, %v249
    %v251 = vpop.f32.mrb[0].mxu0
    %252 = vmatprep.mubr.f32.mxu0 0.0
    %253 = vmatmul.mubr.f32.gmra.mrb[0].mxu0 %v105
    %v254 = vpop.f32.mrb[0].mxu0
    %v255 = vadd.f32 %v131, %v254
    %v256 = vpop.f32.mrb[0].mxu0
    %257 = vmatprep.mubr.f32.mxu0 0.0
    %258 = vmatmul.mubr.f32.gmra.mrb[0].mxu0 %v106
    %v259 = vpop.f32.mrb[0].mxu0
    %v260 = vadd.f32 %v131, %v259
    %v261 = vpop.f32.mrb[0].mxu0
    %262 = vmatprep.mubr.f32.mxu0 0.0
    %263 = vmatmul.mubr.f32.gmra.mrb[0].mxu0 %v107
    %v264 = vpop.f32.mrb[0].mxu0
    %v265 = vadd.f32 %v131, %v264
    %v266 = vpop.f32.mrb[0].mxu0
    %267 = vmatprep.mubr.f32.mxu0 0.0
    %268 = vmatmul.mubr.f32.gmra.mrb[0].mxu0 %v108
    %v269 = vpop.f32.mrb[0].mxu0
    %v270 = vadd.f32 %v131, %v269
    %v271 = vpop.f32.mrb[0].mxu0
    %272 = vmatprep.mubr.f32.mxu0 0.0
    %273 = vmatmul.mubr.f32.gmra.mrb[0].mxu0 %v109
    %v274 = vpop.f32.mrb[0].mxu0
    %v275 = vadd.f32 %v131, %v274
    %v276 = vpop.f32.mrb[0].mxu0
    %277 = vdwg.mxu0
    %v278 = vadd.f32 %v200, %v205
    %v279 = vadd.f32 %v278, %v210
    %v280 = vadd.f32 %v279, %v215
    %v281 = vadd.f32 %v280, %v220
    %v282 = vadd.f32 %v281, %v225
    %v283 = vadd.f32 %v282, %v230
    %v284 = vadd.f32 %v283, %v235
    %v285 = vadd.f32 %v284, %v240
    %v286 = vadd.f32 %v285, %v245
    %v287 = vadd.f32 %v286, %v250
    %v288 = vadd.f32 %v287, %v255
    %v289 = vadd.f32 %v288, %v260
    %v290 = vadd.f32 %v289, %v265
    %v291 = vadd.f32 %v290, %v270
    %v292 = vadd.f32 %v291, %v275
    %v293 = vrot.slane %v292, 4
    %v294 = vadd.f32 %v292, %v293
    %v295 = vrot.slane %v294, 2
    %v296 = vadd.f32 %v294, %v295
    %v297 = vrot.slane %v296, 1
    %v298 = vadd.f32 %v296, %v297
    %v299 = vmul.f32 %v200, %v200
    %v300 = vmul.f32 %v205, %v205
    %v301 = vmul.f32 %v210, %v210
    %v302 = vmul.f32 %v215, %v215
    %v303 = vmul.f32 %v220, %v220
    %v304 = vmul.f32 %v225, %v225
    %v305 = vmul.f32 %v230, %v230
    %v306 = vmul.f32 %v235, %v235
    %v307 = vmul.f32 %v240, %v240
    %v308 = vmul.f32 %v245, %v245
    %v309 = vmul.f32 %v250, %v250
    %v310 = vmul.f32 %v255, %v255
    %v311 = vmul.f32 %v260, %v260
    %v312 = vmul.f32 %v265, %v265
    %v313 = vmul.f32 %v270, %v270
    %v314 = vmul.f32 %v275, %v275
    %v315 = vadd.f32 %v299, %v300
    %v316 = vadd.f32 %v315, %v301
    %v317 = vadd.f32 %v316, %v302
    %v318 = vadd.f32 %v317, %v303
    %v319 = vadd.f32 %v318, %v304
    %v320 = vadd.f32 %v319, %v305
    %v321 = vadd.f32 %v320, %v306
    %v322 = vadd.f32 %v321, %v307
    %v323 = vadd.f32 %v322, %v308
    %v324 = vadd.f32 %v323, %v309
    %v325 = vadd.f32 %v324, %v310
    %v326 = vadd.f32 %v325, %v311
    %v327 = vadd.f32 %v326, %v312
    %v328 = vadd.f32 %v327, %v313
    %v329 = vadd.f32 %v328, %v314
    %v330 = vrot.slane %v329, 4
    %v331 = vadd.f32 %v329, %v330
    %v332 = vrot.slane %v331, 2
    %v333 = vadd.f32 %v331, %v332
    %v334 = vrot.slane %v333, 1
    %v335 = vadd.f32 %v333, %v334
    %v336 = vmul.f32 %v298, 0.0078125
    %v337 = vmul.f32 %v335, 0.0078125
    %v338 = vmul.f32 %v336, %v336
    %v339 = vsub.f32 %v337, %v338
    %v340 = vmax.f32 %v339, 0.0
    %v341 = vld [vmem:[%s3] sm:$0x1]
    %v342 = vadd.f32 %v340, 1e-05
    %v343 = vrsqrt.pop %v342
    %v344 = vmul.f32 %v341, %v343
    %v345 = vld [vmem:[%s4] sm:$0x1]
    %v346 = vmul.f32 %v336, %v344
    %v347 = vsub.f32 %v345, %v346
    %v349 = vlaneseq
    %v350 = vshrl.u32 %v349, 7
    %v351 = vsub.s32 0, %v350
    %v352 = vrot.slane %v344, %v351
    %v354 = vmul.f32 %v200, %v352
    %v355 = vmul.f32 %v205, %v352
    %v356 = vmul.f32 %v210, %v352
    %v357 = vmul.f32 %v215, %v352
    %v358 = vmul.f32 %v220, %v352
    %v359 = vmul.f32 %v225, %v352
    %v360 = vmul.f32 %v230, %v352
    %v361 = vmul.f32 %v235, %v352
    %v362 = vmul.f32 %v240, %v352
    %v363 = vmul.f32 %v245, %v352
    %v364 = vmul.f32 %v250, %v352
    %v365 = vmul.f32 %v255, %v352
    %v366 = vmul.f32 %v260, %v352
    %v367 = vmul.f32 %v265, %v352
    %v368 = vmul.f32 %v270, %v352
    %v369 = vmul.f32 %v275, %v352
    %v371 = vlaneseq
    %v372 = vshrl.u32 %v371, 7
    %v373 = vsub.s32 0, %v372
    %v374 = vrot.slane %v347, %v373
    %v376 = vadd.f32 %v354, %v374
    %v377 = vadd.f32 %v355, %v374
    %v378 = vadd.f32 %v356, %v374
    %v379 = vadd.f32 %v357, %v374
    %v380 = vadd.f32 %v358, %v374
    %v381 = vadd.f32 %v359, %v374
    %v382 = vadd.f32 %v360, %v374
    %v383 = vadd.f32 %v361, %v374
    %v384 = vadd.f32 %v362, %v374
    %v385 = vadd.f32 %v363, %v374
    %v386 = vadd.f32 %v364, %v374
    %v387 = vadd.f32 %v365, %v374
    %v388 = vadd.f32 %v366, %v374
    %v389 = vadd.f32 %v367, %v374
    %v390 = vadd.f32 %v368, %v374
    %v391 = vadd.f32 %v369, %v374
    %v392 = vmax.f32 %v376, 0.0
    %v393 = vmax.f32 %v377, 0.0
    %v394 = vmax.f32 %v378, 0.0
    %v395 = vmax.f32 %v379, 0.0
    %v396 = vmax.f32 %v380, 0.0
    %v397 = vmax.f32 %v381, 0.0
    %v398 = vmax.f32 %v382, 0.0
    %v399 = vmax.f32 %v383, 0.0
    %v400 = vmax.f32 %v384, 0.0
    %v401 = vmax.f32 %v385, 0.0
    %v402 = vmax.f32 %v386, 0.0
    %v403 = vmax.f32 %v387, 0.0
    %v404 = vmax.f32 %v388, 0.0
    %v405 = vmax.f32 %v389, 0.0
    %v406 = vmax.f32 %v390, 0.0
    %v407 = vmax.f32 %v391, 0.0
    %v408 = vld [vmem:[#allocation7] sm:$0xff]
    %v409 = vld [vmem:[#allocation7 + $0x8] sm:$0xff]
    %v410 = vld [vmem:[#allocation7 + $0x10] sm:$0xff]
    %v411 = vld [vmem:[#allocation7 + $0x18] sm:$0xff]
    %v412 = vld [vmem:[#allocation7 + $0x20] sm:$0xff]
    %v413 = vld [vmem:[#allocation7 + $0x28] sm:$0xff]
    %v414 = vld [vmem:[#allocation7 + $0x30] sm:$0xff]
    %v415 = vld [vmem:[#allocation7 + $0x38] sm:$0xff]
    %v416 = vld [vmem:[#allocation7 + $0x40] sm:$0xff]
    %v417 = vld [vmem:[#allocation7 + $0x48] sm:$0xff]
    %v418 = vld [vmem:[#allocation7 + $0x50] sm:$0xff]
    %v419 = vld [vmem:[#allocation7 + $0x58] sm:$0xff]
    %v420 = vld [vmem:[#allocation7 + $0x60] sm:$0xff]
    %v421 = vld [vmem:[#allocation7 + $0x68] sm:$0xff]
    %v422 = vld [vmem:[#allocation7 + $0x70] sm:$0xff]
    %v423 = vld [vmem:[#allocation7 + $0x78] sm:$0xff]
    %v424 = vld [vmem:[%s6] sm:$0x1]
    %v426 = vlaneseq
    %v427 = vshrl.u32 %v426, 7
    %v428 = vsub.s32 0, %v427
    %v429 = vrot.slane %v424, %v428
    %431 = vmatprep.subr.mxu0 0.0
    %432 = vmatpush1.msra.mxu0 %v408
    %433 = vmatprep.subr.mxu0 0.0
    %434 = vmatpush1.msra.mxu0 %v409
    %435 = vmatprep.subr.mxu0 0.0
    %436 = vmatpush1.msra.mxu0 %v410
    %437 = vmatprep.subr.mxu0 0.0
    %438 = vmatpush1.msra.mxu0 %v411
    %439 = vmatprep.subr.mxu0 0.0
    %440 = vmatpush1.msra.mxu0 %v412
    %441 = vmatprep.subr.mxu0 0.0
    %442 = vmatpush1.msra.mxu0 %v413
    %443 = vmatprep.subr.mxu0 0.0
    %444 = vmatpush1.msra.mxu0 %v414
    %445 = vmatprep.subr.mxu0 0.0
    %446 = vmatpush1.msra.mxu0 %v415
    %447 = vmatprep.subr.mxu0 0.0
    %448 = vmatpush1.msra.mxu0 %v416
    %449 = vmatprep.subr.mxu0 0.0
    %450 = vmatpush1.msra.mxu0 %v417
    %451 = vmatprep.subr.mxu0 0.0
    %452 = vmatpush1.msra.mxu0 %v418
    %453 = vmatprep.subr.mxu0 0.0
    %454 = vmatpush1.msra.mxu0 %v419
    %455 = vmatprep.subr.mxu0 0.0
    %456 = vmatpush1.msra.mxu0 %v420
    %457 = vmatprep.subr.mxu0 0.0
    %458 = vmatpush1.msra.mxu0 %v421
    %459 = vmatprep.subr.mxu0 0.0
    %460 = vmatpush1.msra.mxu0 %v422
    %461 = vmatprep.subr.mxu0 0.0
    %462 = vmatpush1.msra.mxu0 %v423
    %463 = vmatprep.subr.mxu0 0.0
    %464 = vmatpush1.msra.mxu0 0.0
    %465 = vmatprep.subr.mxu0 0.0
    %466 = vmatpush1.msra.mxu0 0.0
    %467 = vmatprep.subr.mxu0 0.0
    %468 = vmatpush1.msra.mxu0 0.0
    %469 = vmatprep.subr.mxu0 0.0
    %470 = vmatpush1.msra.mxu0 0.0
    %471 = vmatprep.subr.mxu0 0.0
    %472 = vmatpush1.msra.mxu0 0.0
    %473 = vmatprep.subr.mxu0 0.0
    %474 = vmatpush1.msra.mxu0 0.0
    %475 = vmatprep.subr.mxu0 0.0
    %476 = vmatpush1.msra.mxu0 0.0
    %477 = vmatprep.subr.mxu0 0.0
    %478 = vmatpush1.msra.mxu0 0.0
    %479 = vmatprep.subr.mxu0 0.0
    %480 = vmatpush1.msra.mxu0 0.0
    %481 = vmatprep.subr.mxu0 0.0
    %482 = vmatpush1.msra.mxu0 0.0
    %483 = vmatprep.subr.mxu0 0.0
    %484 = vmatpush1.msra.mxu0 0.0
    %485 = vmatprep.subr.mxu0 0.0
    %486 = vmatpush1.msra.mxu0 0.0
    %487 = vmatprep.subr.mxu0 0.0
    %488 = vmatpush1.msra.mxu0 0.0
    %489 = vmatprep.subr.mxu0 0.0
    %490 = vmatpush1.msra.mxu0 0.0
    %491 = vmatprep.subr.mxu0 0.0
    %492 = vmatpush1.msra.mxu0 0.0
    %493 = vmatprep.subr.mxu0 0.0
    %494 = vmatpush1.msra.mxu0 0.0
    %495 = vmatprep.mubr.f32.mxu0 0.0
    %496 = vmatmul.mubr.f32.gmra.mrb[0].mxu0 %v392
    %v497 = vpop.f32.mrb[0].mxu0
    %v498 = vadd.f32 %v429, %v497
    %v499 = vpop.f32.mrb[0].mxu0
    %500 = vmatprep.mubr.f32.mxu0 0.0
    %501 = vmatmul.mubr.f32.gmra.mrb[0].mxu0 %v393
    %v502 = vpop.f32.mrb[0].mxu0
    %v503 = vadd.f32 %v429, %v502
    %v504 = vpop.f32.mrb[0].mxu0
    %505 = vmatprep.mubr.f32.mxu0 0.0
    %506 = vmatmul.mubr.f32.gmra.mrb[0].mxu0 %v394
    %v507 = vpop.f32.mrb[0].mxu0
    %v508 = vadd.f32 %v429, %v507
    %v509 = vpop.f32.mrb[0].mxu0
    %510 = vmatprep.mubr.f32.mxu0 0.0
    %511 = vmatmul.mubr.f32.gmra.mrb[0].mxu0 %v395
    %v512 = vpop.f32.mrb[0].mxu0
    %v513 = vadd.f32 %v429, %v512
    %v514 = vpop.f32.mrb[0].mxu0
    %515 = vmatprep.mubr.f32.mxu0 0.0
    %516 = vmatmul.mubr.f32.gmra.mrb[0].mxu0 %v396
    %v517 = vpop.f32.mrb[0].mxu0
    %v518 = vadd.f32 %v429, %v517
    %v519 = vpop.f32.mrb[0].mxu0
    %520 = vmatprep.mubr.f32.mxu0 0.0
    %521 = vmatmul.mubr.f32.gmra.mrb[0].mxu0 %v397
    %v522 = vpop.f32.mrb[0].mxu0
    %v523 = vadd.f32 %v429, %v522
    %v524 = vpop.f32.mrb[0].mxu0
    %525 = vmatprep.mubr.f32.mxu0 0.0
    %526 = vmatmul.mubr.f32.gmra.mrb[0].mxu0 %v398
    %v527 = vpop.f32.mrb[0].mxu0
    %v528 = vadd.f32 %v429, %v527
    %v529 = vpop.f32.mrb[0].mxu0
    %530 = vmatprep.mubr.f32.mxu0 0.0
    %531 = vmatmul.mubr.f32.gmra.mrb[0].mxu0 %v399
    %v532 = vpop.f32.mrb[0].mxu0
    %v533 = vadd.f32 %v429, %v532
    %v534 = vpop.f32.mrb[0].mxu0
    %535 = vmatprep.mubr.f32.mxu0 0.0
    %536 = vmatmul.mubr.f32.gmra.mrb[0].mxu0 %v400
    %v537 = vpop.f32.mrb[0].mxu0
    %v538 = vadd.f32 %v429, %v537
    %v539 = vpop.f32.mrb[0].mxu0
    %540 = vmatprep.mubr.f32.mxu0 0.0
    %541 = vmatmul.mubr.f32.gmra.mrb[0].mxu0 %v401
    %v542 = vpop.f32.mrb[0].mxu0
    %v543 = vadd.f32 %v429, %v542
    %v544 = vpop.f32.mrb[0].mxu0
    %545 = vmatprep.mubr.f32.mxu0 0.0
    %546 = vmatmul.mubr.f32.gmra.mrb[0].mxu0 %v402
    %v547 = vpop.f32.mrb[0].mxu0
    %v548 = vadd.f32 %v429, %v547
    %v549 = vpop.f32.mrb[0].mxu0
    %550 = vmatprep.mubr.f32.mxu0 0.0
    %551 = vmatmul.mubr.f32.gmra.mrb[0].mxu0 %v403
    %v552 = vpop.f32.mrb[0].mxu0
    %v553 = vadd.f32 %v429, %v552
    %v554 = vpop.f32.mrb[0].mxu0
    %555 = vmatprep.mubr.f32.mxu0 0.0
    %556 = vmatmul.mubr.f32.gmra.mrb[0].mxu0 %v404
    %v557 = vpop.f32.mrb[0].mxu0
    %v558 = vadd.f32 %v429, %v557
    %v559 = vpop.f32.mrb[0].mxu0
    %560 = vmatprep.mubr.f32.mxu0 0.0
    %561 = vmatmul.mubr.f32.gmra.mrb[0].mxu0 %v405
    %v562 = vpop.f32.mrb[0].mxu0
    %v563 = vadd.f32 %v429, %v562
    %v564 = vpop.f32.mrb[0].mxu0
    %565 = vmatprep.mubr.f32.mxu0 0.0
    %566 = vmatmul.mubr.f32.gmra.mrb[0].mxu0 %v406
    %v567 = vpop.f32.mrb[0].mxu0
    %v568 = vadd.f32 %v429, %v567
    %v569 = vpop.f32.mrb[0].mxu0
    %570 = vmatprep.mubr.f32.mxu0 0.0
    %571 = vmatmul.mubr.f32.gmra.mrb[0].mxu0 %v407
    %v572 = vpop.f32.mrb[0].mxu0
    %v573 = vadd.f32 %v429, %v572
    %v574 = vpop.f32.mrb[0].mxu0
    %575 = vdwg.mxu0
    %v576 = vadd.f32 %v498, %v503
    %v577 = vadd.f32 %v576, %v508
    %v578 = vadd.f32 %v577, %v513
    %v579 = vadd.f32 %v578, %v518
    %v580 = vadd.f32 %v579, %v523
    %v581 = vadd.f32 %v580, %v528
    %v582 = vadd.f32 %v581, %v533
    %v583 = vadd.f32 %v582, %v538
    %v584 = vadd.f32 %v583, %v543
    %v585 = vadd.f32 %v584, %v548
    %v586 = vadd.f32 %v585, %v553
    %v587 = vadd.f32 %v586, %v558
    %v588 = vadd.f32 %v587, %v563
    %v589 = vadd.f32 %v588, %v568
    %v590 = vadd.f32 %v589, %v573
    %v591 = vrot.slane %v590, 4
    %v592 = vadd.f32 %v590, %v591
    %v593 = vrot.slane %v592, 2
    %v594 = vadd.f32 %v592, %v593
    %v595 = vrot.slane %v594, 1
    %v596 = vadd.f32 %v594, %v595
    %v597 = vmul.f32 %v498, %v498
    %v598 = vmul.f32 %v503, %v503
    %v599 = vmul.f32 %v508, %v508
    %v600 = vmul.f32 %v513, %v513
    %v601 = vmul.f32 %v518, %v518
    %v602 = vmul.f32 %v523, %v523
    %v603 = vmul.f32 %v528, %v528
    %v604 = vmul.f32 %v533, %v533
    %v605 = vmul.f32 %v538, %v538
    %v606 = vmul.f32 %v543, %v543
    %v607 = vmul.f32 %v548, %v548
    %v608 = vmul.f32 %v553, %v553
    %v609 = vmul.f32 %v558, %v558
    %v610 = vmul.f32 %v563, %v563
    %v611 = vmul.f32 %v568, %v568
    %v612 = vmul.f32 %v573, %v573
    %v613 = vadd.f32 %v597, %v598
    %v614 = vadd.f32 %v613, %v599
    %v615 = vadd.f32 %v614, %v600
    %v616 = vadd.f32 %v615, %v601
    %v617 = vadd.f32 %v616, %v602
    %v618 = vadd.f32 %v617, %v603
    %v619 = vadd.f32 %v618, %v604
    %v620 = vadd.f32 %v619, %v605
    %v621 = vadd.f32 %v620, %v606
    %v622 = vadd.f32 %v621, %v607
    %v623 = vadd.f32 %v622, %v608
    %v624 = vadd.f32 %v623, %v609
    %v625 = vadd.f32 %v624, %v610
    %v626 = vadd.f32 %v625, %v611
    %v627 = vadd.f32 %v626, %v612
    %v628 = vrot.slane %v627, 4
    %v629 = vadd.f32 %v627, %v628
    %v630 = vrot.slane %v629, 2
    %v631 = vadd.f32 %v629, %v630
    %v632 = vrot.slane %v631, 1
    %v633 = vadd.f32 %v631, %v632
    %v634 = vmul.f32 %v596, 0.0078125
    %v635 = vmul.f32 %v633, 0.0078125
    %v636 = vmul.f32 %v634, %v634
    %v637 = vsub.f32 %v635, %v636
    %v638 = vmax.f32 %v637, 0.0
    %v639 = vld [vmem:[%s7] sm:$0x1]
    %v640 = vadd.f32 %v638, 1e-05
    %v641 = vrsqrt.pop %v640
    %v642 = vmul.f32 %v639, %v641
    %v643 = vld [vmem:[%s8] sm:$0x1]
    %v644 = vmul.f32 %v634, %v642
    %v645 = vsub.f32 %v643, %v644
    %v647 = vlaneseq
    %v648 = vshrl.u32 %v647, 7
    %v649 = vsub.s32 0, %v648
    %v650 = vrot.slane %v642, %v649
    %v652 = vmul.f32 %v498, %v650
    %v653 = vmul.f32 %v503, %v650
    %v654 = vmul.f32 %v508, %v650
    %v655 = vmul.f32 %v513, %v650
    %v656 = vmul.f32 %v518, %v650
    %v657 = vmul.f32 %v523, %v650
    %v658 = vmul.f32 %v528, %v650
    %v659 = vmul.f32 %v533, %v650
    %v660 = vmul.f32 %v538, %v650
    %v661 = vmul.f32 %v543, %v650
    %v662 = vmul.f32 %v548, %v650
    %v663 = vmul.f32 %v553, %v650
    %v664 = vmul.f32 %v558, %v650
    %v665 = vmul.f32 %v563, %v650
    %v666 = vmul.f32 %v568, %v650
    %v667 = vmul.f32 %v573, %v650
    %v669 = vlaneseq
    %v670 = vshrl.u32 %v669, 7
    %v671 = vsub.s32 0, %v670
    %v672 = vrot.slane %v645, %v671
    %v674 = vadd.f32 %v652, %v672
    %v675 = vadd.f32 %v653, %v672
    %v676 = vadd.f32 %v654, %v672
    %v677 = vadd.f32 %v655, %v672
    %v678 = vadd.f32 %v656, %v672
    %v679 = vadd.f32 %v657, %v672
    %v680 = vadd.f32 %v658, %v672
    %v681 = vadd.f32 %v659, %v672
    %v682 = vadd.f32 %v660, %v672
    %v683 = vadd.f32 %v661, %v672
    %v684 = vadd.f32 %v662, %v672
    %v685 = vadd.f32 %v663, %v672
    %v686 = vadd.f32 %v664, %v672
    %v687 = vadd.f32 %v665, %v672
    %v688 = vadd.f32 %v666, %v672
    %v689 = vadd.f32 %v667, %v672
    %v690 = vmax.f32 %v674, 0.0
    %v691 = vmax.f32 %v675, 0.0
    %v692 = vmax.f32 %v676, 0.0
    %v693 = vmax.f32 %v677, 0.0
    %v694 = vmax.f32 %v678, 0.0
    %v695 = vmax.f32 %v679, 0.0
    %v696 = vmax.f32 %v680, 0.0
    %v697 = vmax.f32 %v681, 0.0
    %v698 = vmax.f32 %v682, 0.0
    %v699 = vmax.f32 %v683, 0.0
    %v700 = vmax.f32 %v684, 0.0
    %v701 = vmax.f32 %v685, 0.0
    %v702 = vmax.f32 %v686, 0.0
    %v703 = vmax.f32 %v687, 0.0
    %v704 = vmax.f32 %v688, 0.0
    %v705 = vmax.f32 %v689, 0.0
    %v706 = vld [vmem:[#allocation8] sm:$0xff]
    %v707 = vld [vmem:[#allocation8 + $0x8] sm:$0xff]
    %v708 = vld [vmem:[#allocation8 + $0x10] sm:$0xff]
    %v709 = vld [vmem:[#allocation8 + $0x18] sm:$0xff]
    %v710 = vld [vmem:[#allocation8 + $0x20] sm:$0xff]
    %v711 = vld [vmem:[#allocation8 + $0x28] sm:$0xff]
    %v712 = vld [vmem:[#allocation8 + $0x30] sm:$0xff]
    %v713 = vld [vmem:[#allocation8 + $0x38] sm:$0xff]
    %v714 = vld [vmem:[#allocation8 + $0x40] sm:$0xff]
    %v715 = vld [vmem:[#allocation8 + $0x48] sm:$0xff]
    %v716 = vld [vmem:[#allocation8 + $0x50] sm:$0xff]
    %v717 = vld [vmem:[#allocation8 + $0x58] sm:$0xff]
    %v718 = vld [vmem:[#allocation8 + $0x60] sm:$0xff]
    %v719 = vld [vmem:[#allocation8 + $0x68] sm:$0xff]
    %v720 = vld [vmem:[#allocation8 + $0x70] sm:$0xff]
    %v721 = vld [vmem:[#allocation8 + $0x78] sm:$0xff]
    %v722 = vld [vmem:[%s10] sm:$0x1]
    %v724 = vlaneseq
    %v725 = vshrl.u32 %v724, 7
    %v726 = vsub.s32 0, %v725
    %v727 = vrot.slane %v722, %v726
    %729 = vmatprep.subr.mxu0 0.0
    %730 = vmatpush1.msra.mxu0 %v706
    %731 = vmatprep.subr.mxu0 0.0
    %732 = vmatpush1.msra.mxu0 %v707
    %733 = vmatprep.subr.mxu0 0.0
    %734 = vmatpush1.msra.mxu0 %v708
    %735 = vmatprep.subr.mxu0 0.0
    %736 = vmatpush1.msra.mxu0 %v709
    %737 = vmatprep.subr.mxu0 0.0
    %738 = vmatpush1.msra.mxu0 %v710
    %739 = vmatprep.subr.mxu0 0.0
    %740 = vmatpush1.msra.mxu0 %v711
    %741 = vmatprep.subr.mxu0 0.0
    %742 = vmatpush1.msra.mxu0 %v712
    %743 = vmatprep.subr.mxu0 0.0
    %744 = vmatpush1.msra.mxu0 %v713
    %745 = vmatprep.subr.mxu0 0.0
    %746 = vmatpush1.msra.mxu0 %v714
    %747 = vmatprep.subr.mxu0 0.0
    %748 = vmatpush1.msra.mxu0 %v715
    %749 = vmatprep.subr.mxu0 0.0
    %750 = vmatpush1.msra.mxu0 %v716
    %751 = vmatprep.subr.mxu0 0.0
    %752 = vmatpush1.msra.mxu0 %v717
    %753 = vmatprep.subr.mxu0 0.0
    %754 = vmatpush1.msra.mxu0 %v718
    %755 = vmatprep.subr.mxu0 0.0
    %756 = vmatpush1.msra.mxu0 %v719
    %757 = vmatprep.subr.mxu0 0.0
    %758 = vmatpush1.msra.mxu0 %v720
    %759 = vmatprep.subr.mxu0 0.0
    %760 = vmatpush1.msra.mxu0 %v721
    %761 = vmatprep.subr.mxu0 0.0
    %762 = vmatpush1.msra.mxu0 0.0
    %763 = vmatprep.subr.mxu0 0.0
    %764 = vmatpush1.msra.mxu0 0.0
    %765 = vmatprep.subr.mxu0 0.0
    %766 = vmatpush1.msra.mxu0 0.0
    %767 = vmatprep.subr.mxu0 0.0
    %768 = vmatpush1.msra.mxu0 0.0
    %769 = vmatprep.subr.mxu0 0.0
    %770 = vmatpush1.msra.mxu0 0.0
    %771 = vmatprep.subr.mxu0 0.0
    %772 = vmatpush1.msra.mxu0 0.0
    %773 = vmatprep.subr.mxu0 0.0
    %774 = vmatpush1.msra.mxu0 0.0
    %775 = vmatprep.subr.mxu0 0.0
    %776 = vmatpush1.msra.mxu0 0.0
    %777 = vmatprep.subr.mxu0 0.0
    %778 = vmatpush1.msra.mxu0 0.0
    %779 = vmatprep.subr.mxu0 0.0
    %780 = vmatpush1.msra.mxu0 0.0
    %781 = vmatprep.subr.mxu0 0.0
    %782 = vmatpush1.msra.mxu0 0.0
    %783 = vmatprep.subr.mxu0 0.0
    %784 = vmatpush1.msra.mxu0 0.0
    %785 = vmatprep.subr.mxu0 0.0
    %786 = vmatpush1.msra.mxu0 0.0
    %787 = vmatprep.subr.mxu0 0.0
    %788 = vmatpush1.msra.mxu0 0.0
    %789 = vmatprep.subr.mxu0 0.0
    %790 = vmatpush1.msra.mxu0 0.0
    %791 = vmatprep.subr.mxu0 0.0
    %792 = vmatpush1.msra.mxu0 0.0
    %793 = vmatprep.mubr.f32.mxu0 0.0
    %794 = vmatmul.mubr.f32.gmra.mrb[0].mxu0 %v690
    %v795 = vpop.f32.mrb[0].mxu0
    %v796 = vadd.f32 %v727, %v795
    %v797 = vpop.f32.mrb[0].mxu0
    %798 = vmatprep.mubr.f32.mxu0 0.0
    %799 = vmatmul.mubr.f32.gmra.mrb[0].mxu0 %v691
    %v800 = vpop.f32.mrb[0].mxu0
    %v801 = vadd.f32 %v727, %v800
    %v802 = vpop.f32.mrb[0].mxu0
    %803 = vmatprep.mubr.f32.mxu0 0.0
    %804 = vmatmul.mubr.f32.gmra.mrb[0].mxu0 %v692
    %v805 = vpop.f32.mrb[0].mxu0
    %v806 = vadd.f32 %v727, %v805
    %v807 = vpop.f32.mrb[0].mxu0
    %808 = vmatprep.mubr.f32.mxu0 0.0
    %809 = vmatmul.mubr.f32.gmra.mrb[0].mxu0 %v693
    %v810 = vpop.f32.mrb[0].mxu0
    %v811 = vadd.f32 %v727, %v810
    %v812 = vpop.f32.mrb[0].mxu0
    %813 = vmatprep.mubr.f32.mxu0 0.0
    %814 = vmatmul.mubr.f32.gmra.mrb[0].mxu0 %v694
    %v815 = vpop.f32.mrb[0].mxu0
    %v816 = vadd.f32 %v727, %v815
    %v817 = vpop.f32.mrb[0].mxu0
    %818 = vmatprep.mubr.f32.mxu0 0.0
    %819 = vmatmul.mubr.f32.gmra.mrb[0].mxu0 %v695
    %v820 = vpop.f32.mrb[0].mxu0
    %v821 = vadd.f32 %v727, %v820
    %v822 = vpop.f32.mrb[0].mxu0
    %823 = vmatprep.mubr.f32.mxu0 0.0
    %824 = vmatmul.mubr.f32.gmra.mrb[0].mxu0 %v696
    %v825 = vpop.f32.mrb[0].mxu0
    %v826 = vadd.f32 %v727, %v825
    %v827 = vpop.f32.mrb[0].mxu0
    %828 = vmatprep.mubr.f32.mxu0 0.0
    %829 = vmatmul.mubr.f32.gmra.mrb[0].mxu0 %v697
    %v830 = vpop.f32.mrb[0].mxu0
    %v831 = vadd.f32 %v727, %v830
    %v832 = vpop.f32.mrb[0].mxu0
    %833 = vmatprep.mubr.f32.mxu0 0.0
    %834 = vmatmul.mubr.f32.gmra.mrb[0].mxu0 %v698
    %v835 = vpop.f32.mrb[0].mxu0
    %v836 = vadd.f32 %v727, %v835
    %v837 = vpop.f32.mrb[0].mxu0
    %838 = vmatprep.mubr.f32.mxu0 0.0
    %839 = vmatmul.mubr.f32.gmra.mrb[0].mxu0 %v699
    %v840 = vpop.f32.mrb[0].mxu0
    %v841 = vadd.f32 %v727, %v840
    %v842 = vpop.f32.mrb[0].mxu0
    %843 = vmatprep.mubr.f32.mxu0 0.0
    %844 = vmatmul.mubr.f32.gmra.mrb[0].mxu0 %v700
    %v845 = vpop.f32.mrb[0].mxu0
    %v846 = vadd.f32 %v727, %v845
    %v847 = vpop.f32.mrb[0].mxu0
    %848 = vmatprep.mubr.f32.mxu0 0.0
    %849 = vmatmul.mubr.f32.gmra.mrb[0].mxu0 %v701
    %v850 = vpop.f32.mrb[0].mxu0
    %v851 = vadd.f32 %v727, %v850
    %v852 = vpop.f32.mrb[0].mxu0
    %853 = vmatprep.mubr.f32.mxu0 0.0
    %854 = vmatmul.mubr.f32.gmra.mrb[0].mxu0 %v702
    %v855 = vpop.f32.mrb[0].mxu0
    %v856 = vadd.f32 %v727, %v855
    %v857 = vpop.f32.mrb[0].mxu0
    %858 = vmatprep.mubr.f32.mxu0 0.0
    %859 = vmatmul.mubr.f32.gmra.mrb[0].mxu0 %v703
    %v860 = vpop.f32.mrb[0].mxu0
    %v861 = vadd.f32 %v727, %v860
    %v862 = vpop.f32.mrb[0].mxu0
    %863 = vmatprep.mubr.f32.mxu0 0.0
    %864 = vmatmul.mubr.f32.gmra.mrb[0].mxu0 %v704
    %v865 = vpop.f32.mrb[0].mxu0
    %v866 = vadd.f32 %v727, %v865
    %v867 = vpop.f32.mrb[0].mxu0
    %868 = vmatprep.mubr.f32.mxu0 0.0
    %869 = vmatmul.mubr.f32.gmra.mrb[0].mxu0 %v705
    %v870 = vpop.f32.mrb[0].mxu0
    %v871 = vadd.f32 %v727, %v870
    %v872 = vpop.f32.mrb[0].mxu0
    %873 = vdwg.mxu0
    %874 = vst [vmem:[#allocation10] sm:$0xff] %v796
    %875 = vst [vmem:[#allocation10 + $0x8] sm:$0xff] %v801
    %876 = vst [vmem:[#allocation10 + $0x10] sm:$0xff] %v806
    %877 = vst [vmem:[#allocation10 + $0x18] sm:$0xff] %v811
    %878 = vst [vmem:[#allocation10 + $0x20] sm:$0xff] %v816
    %879 = vst [vmem:[#allocation10 + $0x28] sm:$0xff] %v821
    %880 = vst [vmem:[#allocation10 + $0x30] sm:$0xff] %v826
    %881 = vst [vmem:[#allocation10 + $0x38] sm:$0xff] %v831
    %882 = vst [vmem:[#allocation10 + $0x40] sm:$0xff] %v836
    %883 = vst [vmem:[#allocation10 + $0x48] sm:$0xff] %v841
    %884 = vst [vmem:[#allocation10 + $0x50] sm:$0xff] %v846
    %885 = vst [vmem:[#allocation10 + $0x58] sm:$0xff] %v851
    %886 = vst [vmem:[#allocation10 + $0x60] sm:$0xff] %v856
    %887 = vst [vmem:[#allocation10 + $0x68] sm:$0xff] %v861
    %888 = vst [vmem:[#allocation10 + $0x70] sm:$0xff] %v866
    %889 = vst [vmem:[#allocation10 + $0x78] sm:$0xff] %v871
    // Predicated region
    $region62: #{tpu_custom_call.1} parent=1 // pred_check
      _
    $region63: #{tpu_custom_call.1} parent=1 // pred_check_branch
      %891 = sbr.rel (0) target = $region65
    $region64: #{tpu_custom_call.1} parent=1 // pred_region
      %s893 = ssub.s32 2048, 2048
      %894 = vsyncadd [#allocation4], %s893
      %s895 = sshll.u32 [#allocation10], 4
      %s896 = int_to_ptr.vmem [resolvable:$true] %s895
      %901 = dma.vmem_to_hbm [thread:$0]  %s896, 2048, %s11, [#allocation4], 128, 128, 8
    $region65: #{tpu_custom_call.1} parent=1 // pred_fallthru
      _
    // Predicated region
    $region66: #{tpu_custom_call.1} parent=1 // pred_check
      _
    $region67: #{tpu_custom_call.1} parent=1 // pred_check_branch
      %903 = sbr.rel (0) target = $region69
    $region68: #{tpu_custom_call.1} parent=1 // pred_region
      %904 = dma.done [#allocation4], 2048
    $region69: #{tpu_custom_call.1} parent=1 // pred_fallthru
      _
    %905 = vsyncpa [#allocation3], 1
    %906 = vsyncpa [#allocation6], 1
    %907 = vsyncpa [#allocation9], 1
    %908 = vsyncpa [#allocation4], 1

</llo_original>
